<compile_context>
chip_gen: v6e
topology: v6e:2x2x1
jax: 0.10.0
libtpu: 0.0.40
codegen_flags: <defaults>
</compile_context>

<pallas_src>
import functools

import jax
import jax.numpy as jnp
from jax.experimental import pallas as pl
from jax.experimental.pallas import tpu as pltpu


# ----------------------------------------------------------------------------
# Pallas kernel: one batch tile (Bt, Cin, N) -> (Bt, Cout, N).
# ----------------------------------------------------------------------------
def _operator_block_kernel(x_ref, F_ref, W_ref, IB_ref, CW_ref, gbc_ref, o_ref,
                           *, Bt, Cin, Cout, M, N):
    f32 = jnp.float32
    cdt = x_ref.dtype                                      # MXU / mixing dtype
    x3 = x_ref[...]                                        # (Bt, Cin, N)

    # (1) forward rfft (norm='forward') for the whole tile: ONE MXU matmul
    #     against the fused [cos | -sin]/N basis, f32 accumulation.
    xri = jnp.dot(x3.reshape(Bt * Cin, N), F_ref[...],
                  preferred_element_type=f32)              # (Bt*Cin, 2M)
    xri3 = xri.astype(cdt).reshape(Bt, Cin, 2 * M)         # (Bt, Cin, 2M)

    # (2) per-mode complex channel mixing (out_ft = sum_i x_ft[:, i] * w[i]):
    #     direct complex MAC (4 mul + 4 add), vectorized over the whole
    #     (Bt, Cout, M) slab; only the small static Cin loop is unrolled.
    W = W_ref[...]                                         # (Cin, Cout, 2M) = [wr|wi]
    yr = jnp.zeros((Bt, Cout, M), cdt)
    yi = jnp.zeros((Bt, Cout, M), cdt)
    for i in range(Cin):
        xr_i = xri3[:, i, :M][:, None, :]                  # (Bt, 1, M)
        xi_i = xri3[:, i, M:][:, None, :]
        wr_i = W[i, :, :M][None, :, :]                     # (1, Cout, M)
        wi_i = W[i, :, M:][None, :, :]
        yr = yr + (xr_i * wr_i - xi_i * wi_i)
        yi = yi + (xr_i * wi_i + xi_i * wr_i)

    # (3) inverse rfft (norm='forward') for the whole tile: ONE batched matmul
    #     [yr | yi] (Bt*Cout, 2M) @ [ck*cos ; -ck*sin] (2M, N).
    yri = jnp.concatenate([yr, yi], axis=2).reshape(Bt * Cout, 2 * M)
    x1 = jnp.dot(yri, IB_ref[...], preferred_element_type=f32)   # (Bt*Cout, N)

    # (4) pointwise 1x1 conv: one small batched matmul over the Bt samples.
    cw_b = jnp.broadcast_to(CW_ref[...][None], (Bt, Cout, Cin))
    x2 = jnp.einsum("boi,bin->bon", cw_b, x3,
                    preferred_element_type=f32)            # (Bt, Cout, N)

    # (5) f32 epilogue: conv bias + InstanceNorm1d (one-pass stats, biased
    #     variance, eps=1e-5) + affine + exact (erf) GELU.
    gbc = gbc_ref[...]                                     # (Cout, 3) = [gamma|beta|cb]
    gamma = gbc[:, 0:1][None]                              # (1, Cout, 1)
    beta = gbc[:, 1:2][None]
    cb = gbc[:, 2:3][None]

    s = x1.reshape(Bt, Cout, N) + x2 + cb
    inv_n = jnp.float32(1.0 / N)
    mean = jnp.sum(s, axis=2, keepdims=True) * inv_n
    var = jnp.sum(s * s, axis=2, keepdims=True) * inv_n - mean * mean
    y = gamma * ((s - mean) * jax.lax.rsqrt(var + 1e-5)) + beta
    inv_sqrt2 = jnp.float32(0.7071067811865476)
    o_ref[...] = (0.5 * y * (1.0 + jax.lax.erf(y * inv_sqrt2))).astype(o_ref.dtype)


# ----------------------------------------------------------------------------
# Batch-tile heuristic.
# ----------------------------------------------------------------------------
def _pick_batch_tile(B, Cin, Cout):
    # ~256 MXU rows per step for the forward (Bt*Cin) / inverse (Bt*Cout)
    # matmuls (TODO(synk): 512 on v5e), multiples of 8 so the in-kernel
    # (Bt, C, *) <-> (Bt*C, *) reshapes stay layout-free, and >= 2 grid steps
    # so both v7x TensorCores get work under dimension_semantics=('parallel',).
    rows = max(Cin, Cout, 1)
    bt = max(1, 256 // rows)
    if bt >= 8:
        bt = (bt // 8) * 8
    bt = min(bt, B)
    if B > 1 and bt >= B:
        bt = max(1, B // 2)
    return bt


# ----------------------------------------------------------------------------
# Wrapper: builds fused DFT bases / packed params (glue) and launches the kernel.
# ----------------------------------------------------------------------------
def operator_block_1d(x, params, *, modes1, dim1, compute_dtype=jnp.float32):
    B, Cin, N = x.shape
    assert dim1 == N, "this script covers the identity-interpolation case (dim1 == input_dim1)"
    M = int(modes1)
    assert M <= N // 2 + 1 and M <= dim1 // 2 + 1
    Cout = params["conv_w"].shape[0]
    f32 = jnp.float32
    cdt = compute_dtype

    # forward real-DFT basis (norm='forward': 1/N folded in), fused [cos | -sin]
    n_in = jnp.arange(N, dtype=f32)
    k = jnp.arange(M, dtype=f32)
    ang_f = 2.0 * jnp.pi * jnp.outer(n_in, k) / N                       # (N, M)
    F = (jnp.concatenate([jnp.cos(ang_f), -jnp.sin(ang_f)], axis=1) / N).astype(cdt)  # (N, 2M)

    # inverse real-DFT basis with Hermitian doubling ck folded in, fused rows
    n_out = jnp.arange(dim1, dtype=f32)
    ang_i = 2.0 * jnp.pi * jnp.outer(k, n_out) / dim1                   # (M, dim1)
    is_dc = k == 0
    is_nyq = (dim1 % 2 == 0) & (k == dim1 // 2)
    ck = jnp.where(is_dc | is_nyq, 1.0, 2.0).astype(f32)[:, None]
    IB = jnp.concatenate([ck * jnp.cos(ang_i), -(ck * jnp.sin(ang_i))],
                         axis=0).astype(cdt)                            # (2M, dim1)

    # packed spectral weights [wr | wi], conv weight, epilogue params
    W = jnp.concatenate([params["wr"].astype(f32), params["wi"].astype(f32)],
                        axis=2).astype(cdt)                             # (Cin, Cout, 2M)
    CW = params["conv_w"].astype(cdt)                                   # (Cout, Cin)
    gbc = jnp.stack([params["gamma"], params["beta"], params["conv_b"]],
                    axis=1).astype(f32)                                 # (Cout, 3)

    Bt = _pick_batch_tile(B, Cin, Cout)
    Bp = ((B + Bt - 1) // Bt) * Bt
    xp = x.astype(cdt)
    if Bp != B:
        xp = jnp.pad(xp, ((0, Bp - B), (0, 0), (0, 0)))

    kernel = functools.partial(_operator_block_kernel,
                               Bt=Bt, Cin=Cin, Cout=Cout, M=M, N=N)

    out = pl.pallas_call(
        kernel,
        out_shape=jax.ShapeDtypeStruct((Bp, Cout, dim1), f32),
        grid_spec=pltpu.PrefetchScalarGridSpec(
            num_scalar_prefetch=0,
            grid=(Bp // Bt,),
            in_specs=[
                pl.BlockSpec((Bt, Cin, N), lambda g: (g, 0, 0)),        # x tile
                pl.BlockSpec((N, 2 * M), lambda g: (0, 0)),             # F  (const)
                pl.BlockSpec((Cin, Cout, 2 * M), lambda g: (0, 0, 0)),  # W  (const)
                pl.BlockSpec((2 * M, dim1), lambda g: (0, 0)),          # IB (const)
                pl.BlockSpec((Cout, Cin), lambda g: (0, 0)),            # conv_w
                pl.BlockSpec((Cout, 3), lambda g: (0, 0)),              # [gamma|beta|bias]
            ],
            out_specs=pl.BlockSpec((Bt, Cout, dim1), lambda g: (g, 0, 0)),
        ),
        compiler_params=pltpu.CompilerParams(
            dimension_semantics=("parallel",),
            vmem_limit_bytes=64 * 1024 * 1024),
    )(xp, F, W, IB, CW, gbc)

    return out[:B]


# ----------------------------------------------------------------------------
# Pure-JAX reference (mirrors the PyTorch module) for validation.
# ----------------------------------------------------------------------------
def operator_block_1d_reference(x, params, *, modes1, dim1):
    x_ft = jnp.fft.rfft(x, norm="forward")                              # (B, Cin, N//2+1)
    w = params["wr"] + 1j * params["wi"]                                # (Cin, Cout, M)
    B = x.shape[0]
    Cout = params["conv_w"].shape[0]
    out_ft = jnp.zeros((B, Cout, dim1 // 2 + 1), dtype=jnp.complex64)
    mixed = jnp.einsum("bix,iox->box", x_ft[:, :, :modes1], w)
    out_ft = out_ft.at[:, :, :modes1].set(mixed)
    x1 = jnp.fft.irfft(out_ft, n=dim1, norm="forward")                  # (B, Cout, dim1)
    x2 = jnp.einsum("oi,bin->bon", params["conv_w"], x) + params["conv_b"][None, :, None]
    s = x1 + x2
    mean = s.mean(axis=2, keepdims=True)
    var = ((s - mean) ** 2).mean(axis=2, keepdims=True)
    xn = (s - mean) / jnp.sqrt(var + 1e-5)
    y = params["gamma"][None, :, None] * xn + params["beta"][None, :, None]
    return 0.5 * y * (1.0 + jax.lax.erf(y * 0.7071067811865476))


# ----------------------------------------------------------------------------
if __name__ == "__main__":
    B, Cin, Cout, N = 2, 4, 8, 16
    modes1 = N // 2            # default modes1 = dim1 // 2
    dim1 = N                   # output grid size == input grid size

    key = jax.random.PRNGKey(0)
    kx, kwr, kwi, kcw, kcb, kg, kb = jax.random.split(key, 7)

    scale = (1.0 / (2.0 * Cin)) ** 0.5
    params = {
        # SpectralConv1d_Uno.weights1 (complex) -> real/imag parts
        "wr": scale * jax.random.normal(kwr, (Cin, Cout, modes1), jnp.float32),
        "wi": scale * jax.random.normal(kwi, (Cin, Cout, modes1), jnp.float32),
        # pointwise 1x1 Conv1d
        "conv_w": 0.5 * jax.random.normal(kcw, (Cout, Cin), jnp.float32),
        "conv_b": 0.1 * jax.random.normal(kcb, (Cout,), jnp.float32),
        # InstanceNorm1d affine params
        "gamma": 1.0 + 0.1 * jax.random.normal(kg, (Cout,), jnp.float32),
        "beta": 0.1 * jax.random.normal(kb, (Cout,), jnp.float32),
    }
    x = jax.random.normal(kx, (B, Cin, N), jnp.float32)

    ref = operator_block_1d_reference(x, params, modes1=modes1, dim1=dim1)

    # f32 path (matches PyTorch numerics).
    out = operator_block_1d(x, params, modes1=modes1, dim1=dim1)
    out = jax.block_until_ready(out)
    assert out.shape == (B, Cout, dim1)
    assert jnp.allclose(out, ref, atol=2e-3, rtol=2e-3), "f32 mismatch vs. JAX reference"

    # bf16 operand path (production default for v6e/v7x; f32 MXU accumulation
    # and f32 epilogue).  Looser tolerance — validates the path compiles/runs.
    out_bf16 = operator_block_1d(x, params, modes1=modes1, dim1=dim1,
                                 compute_dtype=jnp.bfloat16)
    out_bf16 = jax.block_until_ready(out_bf16)
    assert jnp.allclose(out_bf16, ref, atol=1.5e-1, rtol=1.5e-1), "bf16 mismatch vs. JAX reference"

    print("KERNEL_OK")
</pallas_src>

<mosaic_0001>
module attributes {stable_mosaic.version = 11 : i64} {
  func.func @_operator_block_kernel(%arg0: i32, %arg1: memref<1x4x16xf32, #tpu.memory_space<vmem>>, %arg2: memref<16x16xf32, #tpu.memory_space<vmem>>, %arg3: memref<4x8x16xf32, #tpu.memory_space<vmem>>, %arg4: memref<16x16xf32, #tpu.memory_space<vmem>>, %arg5: memref<8x4xf32, #tpu.memory_space<vmem>>, %arg6: memref<8x3xf32, #tpu.memory_space<vmem>>, %arg7: memref<1x8x16xf32, #tpu.memory_space<vmem>>) attributes {dimension_semantics = [#tpu.dimension_semantics<parallel>], iteration_bounds = array<i64: 2>, scalar_prefetch = 0 : i64, scratch_operands = 0 : i64, tpu.core_type = #tpu.core_type<tc>, window_params = [{transform_indices = @transform_0, window_bounds = array<i64: 1, 4, 16>}, {pipeline_mode = #tpu.pipeline_mode<synchronous>, transform_indices = @transform_1, window_bounds = array<i64: 16, 16>}, {pipeline_mode = #tpu.pipeline_mode<synchronous>, transform_indices = @transform_2, window_bounds = array<i64: 4, 8, 16>}, {pipeline_mode = #tpu.pipeline_mode<synchronous>, transform_indices = @transform_3, window_bounds = array<i64: 16, 16>}, {pipeline_mode = #tpu.pipeline_mode<synchronous>, transform_indices = @transform_4, window_bounds = array<i64: 8, 4>}, {pipeline_mode = #tpu.pipeline_mode<synchronous>, transform_indices = @transform_5, window_bounds = array<i64: 8, 3>}, {transform_indices = @transform_6, window_bounds = array<i64: 1, 8, 16>}]} {
    %c0 = arith.constant 0 : index
    %c0_0 = arith.constant 0 : index
    %c0_1 = arith.constant 0 : index
    %0 = vector.load %arg1[%c0, %c0_0, %c0_1] : memref<1x4x16xf32, #tpu.memory_space<vmem>>, vector<1x4x16xf32>
    %1 = vector.shape_cast %0 : vector<1x4x16xf32> to vector<4x16xf32>
    %c0_2 = arith.constant 0 : index
    %c0_3 = arith.constant 0 : index
    %2 = vector.load %arg2[%c0_2, %c0_3] : memref<16x16xf32, #tpu.memory_space<vmem>>, vector<16x16xf32>
    %cst = arith.constant dense<0.000000e+00> : vector<4x16xf32>
    %3 = tpu.matmul %1, %2, %cst {dimension_numbers = #tpu.dot_dimension_numbers<[1], [0], [0], [1], [0, 0, 1, 1], [], []>} : vector<4x16xf32>, vector<16x16xf32>, vector<4x16xf32> -> vector<4x16xf32>
    %4 = vector.shape_cast %3 : vector<4x16xf32> to vector<1x4x16xf32>
    %c0_4 = arith.constant 0 : index
    %c0_5 = arith.constant 0 : index
    %c0_6 = arith.constant 0 : index
    %5 = vector.load %arg3[%c0_4, %c0_5, %c0_6] : memref<4x8x16xf32, #tpu.memory_space<vmem>>, vector<4x8x16xf32>
    %cst_7 = arith.constant 0.000000e+00 : f32
    %6 = vector.broadcast %cst_7 : f32 to vector<1x8x8xf32>
    %cst_8 = arith.constant 0.000000e+00 : f32
    %7 = vector.broadcast %cst_8 : f32 to vector<1x8x8xf32>
    %8 = vector.extract_strided_slice %4 {offsets = [0, 0, 0], sizes = [1, 1, 8], strides = [1, 1, 1]} : vector<1x4x16xf32> to vector<1x1x8xf32>
    %9 = vector.shape_cast %8 : vector<1x1x8xf32> to vector<1x8xf32>
    %10 = vector.shape_cast %9 : vector<1x8xf32> to vector<1x1x8xf32>
    %11 = vector.extract_strided_slice %4 {offsets = [0, 0, 8], sizes = [1, 1, 8], strides = [1, 1, 1]} : vector<1x4x16xf32> to vector<1x1x8xf32>
    %12 = vector.shape_cast %11 : vector<1x1x8xf32> to vector<1x8xf32>
    %13 = vector.shape_cast %12 : vector<1x8xf32> to vector<1x1x8xf32>
    %14 = vector.extract_strided_slice %5 {offsets = [0, 0, 0], sizes = [1, 8, 8], strides = [1, 1, 1]} : vector<4x8x16xf32> to vector<1x8x8xf32>
    %15 = vector.shape_cast %14 : vector<1x8x8xf32> to vector<8x8xf32>
    %16 = vector.shape_cast %15 : vector<8x8xf32> to vector<1x8x8xf32>
    %17 = vector.extract_strided_slice %5 {offsets = [0, 0, 8], sizes = [1, 8, 8], strides = [1, 1, 1]} : vector<4x8x16xf32> to vector<1x8x8xf32>
    %18 = vector.shape_cast %17 : vector<1x8x8xf32> to vector<8x8xf32>
    %19 = vector.shape_cast %18 : vector<8x8xf32> to vector<1x8x8xf32>
    %20 = vector.broadcast %10 : vector<1x1x8xf32> to vector<1x8x8xf32>
    %21 = arith.mulf %20, %16 : vector<1x8x8xf32>
    %22 = vector.broadcast %13 : vector<1x1x8xf32> to vector<1x8x8xf32>
    %23 = arith.mulf %22, %19 : vector<1x8x8xf32>
    %24 = arith.subf %21, %23 : vector<1x8x8xf32>
    %25 = arith.addf %6, %24 : vector<1x8x8xf32>
    %26 = vector.broadcast %10 : vector<1x1x8xf32> to vector<1x8x8xf32>
    %27 = arith.mulf %26, %19 : vector<1x8x8xf32>
    %28 = vector.broadcast %13 : vector<1x1x8xf32> to vector<1x8x8xf32>
    %29 = arith.mulf %28, %16 : vector<1x8x8xf32>
    %30 = arith.addf %27, %29 : vector<1x8x8xf32>
    %31 = arith.addf %7, %30 : vector<1x8x8xf32>
    %32 = vector.extract_strided_slice %4 {offsets = [0, 1, 0], sizes = [1, 1, 8], strides = [1, 1, 1]} : vector<1x4x16xf32> to vector<1x1x8xf32>
    %33 = vector.shape_cast %32 : vector<1x1x8xf32> to vector<1x8xf32>
    %34 = vector.shape_cast %33 : vector<1x8xf32> to vector<1x1x8xf32>
    %35 = vector.extract_strided_slice %4 {offsets = [0, 1, 8], sizes = [1, 1, 8], strides = [1, 1, 1]} : vector<1x4x16xf32> to vector<1x1x8xf32>
    %36 = vector.shape_cast %35 : vector<1x1x8xf32> to vector<1x8xf32>
    %37 = vector.shape_cast %36 : vector<1x8xf32> to vector<1x1x8xf32>
    %38 = vector.extract_strided_slice %5 {offsets = [1, 0, 0], sizes = [1, 8, 8], strides = [1, 1, 1]} : vector<4x8x16xf32> to vector<1x8x8xf32>
    %39 = vector.shape_cast %38 : vector<1x8x8xf32> to vector<8x8xf32>
    %40 = vector.shape_cast %39 : vector<8x8xf32> to vector<1x8x8xf32>
    %41 = vector.extract_strided_slice %5 {offsets = [1, 0, 8], sizes = [1, 8, 8], strides = [1, 1, 1]} : vector<4x8x16xf32> to vector<1x8x8xf32>
    %42 = vector.shape_cast %41 : vector<1x8x8xf32> to vector<8x8xf32>
    %43 = vector.shape_cast %42 : vector<8x8xf32> to vector<1x8x8xf32>
    %44 = vector.broadcast %34 : vector<1x1x8xf32> to vector<1x8x8xf32>
    %45 = arith.mulf %44, %40 : vector<1x8x8xf32>
    %46 = vector.broadcast %37 : vector<1x1x8xf32> to vector<1x8x8xf32>
    %47 = arith.mulf %46, %43 : vector<1x8x8xf32>
    %48 = arith.subf %45, %47 : vector<1x8x8xf32>
    %49 = arith.addf %25, %48 : vector<1x8x8xf32>
    %50 = vector.broadcast %34 : vector<1x1x8xf32> to vector<1x8x8xf32>
    %51 = arith.mulf %50, %43 : vector<1x8x8xf32>
    %52 = vector.broadcast %37 : vector<1x1x8xf32> to vector<1x8x8xf32>
    %53 = arith.mulf %52, %40 : vector<1x8x8xf32>
    %54 = arith.addf %51, %53 : vector<1x8x8xf32>
    %55 = arith.addf %31, %54 : vector<1x8x8xf32>
    %56 = vector.extract_strided_slice %4 {offsets = [0, 2, 0], sizes = [1, 1, 8], strides = [1, 1, 1]} : vector<1x4x16xf32> to vector<1x1x8xf32>
    %57 = vector.shape_cast %56 : vector<1x1x8xf32> to vector<1x8xf32>
    %58 = vector.shape_cast %57 : vector<1x8xf32> to vector<1x1x8xf32>
    %59 = vector.extract_strided_slice %4 {offsets = [0, 2, 8], sizes = [1, 1, 8], strides = [1, 1, 1]} : vector<1x4x16xf32> to vector<1x1x8xf32>
    %60 = vector.shape_cast %59 : vector<1x1x8xf32> to vector<1x8xf32>
    %61 = vector.shape_cast %60 : vector<1x8xf32> to vector<1x1x8xf32>
    %62 = vector.extract_strided_slice %5 {offsets = [2, 0, 0], sizes = [1, 8, 8], strides = [1, 1, 1]} : vector<4x8x16xf32> to vector<1x8x8xf32>
    %63 = vector.shape_cast %62 : vector<1x8x8xf32> to vector<8x8xf32>
    %64 = vector.shape_cast %63 : vector<8x8xf32> to vector<1x8x8xf32>
    %65 = vector.extract_strided_slice %5 {offsets = [2, 0, 8], sizes = [1, 8, 8], strides = [1, 1, 1]} : vector<4x8x16xf32> to vector<1x8x8xf32>
    %66 = vector.shape_cast %65 : vector<1x8x8xf32> to vector<8x8xf32>
    %67 = vector.shape_cast %66 : vector<8x8xf32> to vector<1x8x8xf32>
    %68 = vector.broadcast %58 : vector<1x1x8xf32> to vector<1x8x8xf32>
    %69 = arith.mulf %68, %64 : vector<1x8x8xf32>
    %70 = vector.broadcast %61 : vector<1x1x8xf32> to vector<1x8x8xf32>
    %71 = arith.mulf %70, %67 : vector<1x8x8xf32>
    %72 = arith.subf %69, %71 : vector<1x8x8xf32>
    %73 = arith.addf %49, %72 : vector<1x8x8xf32>
    %74 = vector.broadcast %58 : vector<1x1x8xf32> to vector<1x8x8xf32>
    %75 = arith.mulf %74, %67 : vector<1x8x8xf32>
    %76 = vector.broadcast %61 : vector<1x1x8xf32> to vector<1x8x8xf32>
    %77 = arith.mulf %76, %64 : vector<1x8x8xf32>
    %78 = arith.addf %75, %77 : vector<1x8x8xf32>
    %79 = arith.addf %55, %78 : vector<1x8x8xf32>
    %80 = vector.extract_strided_slice %4 {offsets = [0, 3, 0], sizes = [1, 1, 8], strides = [1, 1, 1]} : vector<1x4x16xf32> to vector<1x1x8xf32>
    %81 = vector.shape_cast %80 : vector<1x1x8xf32> to vector<1x8xf32>
    %82 = vector.shape_cast %81 : vector<1x8xf32> to vector<1x1x8xf32>
    %83 = vector.extract_strided_slice %4 {offsets = [0, 3, 8], sizes = [1, 1, 8], strides = [1, 1, 1]} : vector<1x4x16xf32> to vector<1x1x8xf32>
    %84 = vector.shape_cast %83 : vector<1x1x8xf32> to vector<1x8xf32>
    %85 = vector.shape_cast %84 : vector<1x8xf32> to vector<1x1x8xf32>
    %86 = vector.extract_strided_slice %5 {offsets = [3, 0, 0], sizes = [1, 8, 8], strides = [1, 1, 1]} : vector<4x8x16xf32> to vector<1x8x8xf32>
    %87 = vector.shape_cast %86 : vector<1x8x8xf32> to vector<8x8xf32>
    %88 = vector.shape_cast %87 : vector<8x8xf32> to vector<1x8x8xf32>
    %89 = vector.extract_strided_slice %5 {offsets = [3, 0, 8], sizes = [1, 8, 8], strides = [1, 1, 1]} : vector<4x8x16xf32> to vector<1x8x8xf32>
    %90 = vector.shape_cast %89 : vector<1x8x8xf32> to vector<8x8xf32>
    %91 = vector.shape_cast %90 : vector<8x8xf32> to vector<1x8x8xf32>
    %92 = vector.broadcast %82 : vector<1x1x8xf32> to vector<1x8x8xf32>
    %93 = arith.mulf %92, %88 : vector<1x8x8xf32>
    %94 = vector.broadcast %85 : vector<1x1x8xf32> to vector<1x8x8xf32>
    %95 = arith.mulf %94, %91 : vector<1x8x8xf32>
    %96 = arith.subf %93, %95 : vector<1x8x8xf32>
    %97 = arith.addf %73, %96 : vector<1x8x8xf32>
    %98 = vector.broadcast %82 : vector<1x1x8xf32> to vector<1x8x8xf32>
    %99 = arith.mulf %98, %91 : vector<1x8x8xf32>
    %100 = vector.broadcast %85 : vector<1x1x8xf32> to vector<1x8x8xf32>
    %101 = arith.mulf %100, %88 : vector<1x8x8xf32>
    %102 = arith.addf %99, %101 : vector<1x8x8xf32>
    %103 = arith.addf %79, %102 : vector<1x8x8xf32>
    %104 = tpu.concatenate %97, %103 in 2 : vector<1x8x8xf32>, vector<1x8x8xf32> -> vector<1x8x16xf32>
    %105 = vector.shape_cast %104 : vector<1x8x16xf32> to vector<8x16xf32>
    %c0_9 = arith.constant 0 : index
    %c0_10 = arith.constant 0 : index
    %106 = vector.load %arg4[%c0_9, %c0_10] : memref<16x16xf32, #tpu.memory_space<vmem>>, vector<16x16xf32>
    %cst_11 = arith.constant dense<0.000000e+00> : vector<8x16xf32>
    %107 = tpu.matmul %105, %106, %cst_11 {dimension_numbers = #tpu.dot_dimension_numbers<[1], [0], [0], [1], [0, 0, 1, 1], [], []>} : vector<8x16xf32>, vector<16x16xf32>, vector<8x16xf32> -> vector<8x16xf32>
    %c0_12 = arith.constant 0 : index
    %c0_13 = arith.constant 0 : index
    %108 = vector.load %arg5[%c0_12, %c0_13] : memref<8x4xf32, #tpu.memory_space<vmem>>, vector<8x4xf32>
    %109 = vector.shape_cast %108 : vector<8x4xf32> to vector<1x8x4xf32>
    "tpu.trace_start"() <{level = 10 : i32, message = "boi,bin->bon"}> : () -> ()
    %cst_14 = arith.constant dense<0.000000e+00> : vector<1x8x16xf32>
    %110 = tpu.matmul %109, %0, %cst_14 {dimension_numbers = #tpu.dot_dimension_numbers<[2], [1], [1], [2], [0, 0, 0, 1, 1, 2], [0], [0]>} : vector<1x8x4xf32>, vector<1x4x16xf32>, vector<1x8x16xf32> -> vector<1x8x16xf32>
    "tpu.trace_stop"() : () -> ()
    %c0_15 = arith.constant 0 : index
    %c0_16 = arith.constant 0 : index
    %111 = vector.load %arg6[%c0_15, %c0_16] : memref<8x3xf32, #tpu.memory_space<vmem>>, vector<8x3xf32>
    %112 = vector.extract_strided_slice %111 {offsets = [0, 0], sizes = [8, 1], strides = [1, 1]} : vector<8x3xf32> to vector<8x1xf32>
    %113 = vector.shape_cast %112 : vector<8x1xf32> to vector<1x8x1xf32>
    %114 = vector.extract_strided_slice %111 {offsets = [0, 1], sizes = [8, 1], strides = [1, 1]} : vector<8x3xf32> to vector<8x1xf32>
    %115 = vector.shape_cast %114 : vector<8x1xf32> to vector<1x8x1xf32>
    %116 = vector.extract_strided_slice %111 {offsets = [0, 2], sizes = [8, 1], strides = [1, 1]} : vector<8x3xf32> to vector<8x1xf32>
    %117 = vector.shape_cast %116 : vector<8x1xf32> to vector<1x8x1xf32>
    %118 = vector.shape_cast %107 : vector<8x16xf32> to vector<1x8x16xf32>
    %119 = arith.addf %118, %110 : vector<1x8x16xf32>
    %120 = vector.broadcast %117 : vector<1x8x1xf32> to vector<1x8x16xf32>
    %121 = arith.addf %119, %120 : vector<1x8x16xf32>
    %cst_17 = arith.constant dense<0.000000e+00> : vector<1x8xf32>
    %122 = vector.multi_reduction <add>, %121, %cst_17 [2] : vector<1x8x16xf32> to vector<1x8xf32>
    %123 = vector.shape_cast %122 : vector<1x8xf32> to vector<1x8x1xf32>
    %cst_18 = arith.constant 6.250000e-02 : f32
    %124 = vector.broadcast %cst_18 : f32 to vector<1x8x1xf32>
    %125 = arith.mulf %123, %124 : vector<1x8x1xf32>
    %126 = arith.mulf %121, %121 : vector<1x8x16xf32>
    %cst_19 = arith.constant dense<0.000000e+00> : vector<1x8xf32>
    %127 = vector.multi_reduction <add>, %126, %cst_19 [2] : vector<1x8x16xf32> to vector<1x8xf32>
    %128 = vector.shape_cast %127 : vector<1x8xf32> to vector<1x8x1xf32>
    %cst_20 = arith.constant 6.250000e-02 : f32
    %129 = vector.broadcast %cst_20 : f32 to vector<1x8x1xf32>
    %130 = arith.mulf %128, %129 : vector<1x8x1xf32>
    %131 = arith.mulf %125, %125 : vector<1x8x1xf32>
    %132 = arith.subf %130, %131 : vector<1x8x1xf32>
    %133 = vector.broadcast %125 : vector<1x8x1xf32> to vector<1x8x16xf32>
    %134 = arith.subf %121, %133 : vector<1x8x16xf32>
    %cst_21 = arith.constant 9.99999974E-6 : f32
    %135 = vector.broadcast %cst_21 : f32 to vector<1x8x1xf32>
    %136 = arith.addf %132, %135 : vector<1x8x1xf32>
    %137 = math.rsqrt %136 : vector<1x8x1xf32>
    %138 = vector.broadcast %137 : vector<1x8x1xf32> to vector<1x8x16xf32>
    %139 = arith.mulf %134, %138 : vector<1x8x16xf32>
    %140 = vector.broadcast %113 : vector<1x8x1xf32> to vector<1x8x16xf32>
    %141 = arith.mulf %140, %139 : vector<1x8x16xf32>
    %142 = vector.broadcast %115 : vector<1x8x1xf32> to vector<1x8x16xf32>
    %143 = arith.addf %141, %142 : vector<1x8x16xf32>
    %cst_22 = arith.constant 5.000000e-01 : f32
    %144 = vector.broadcast %cst_22 : f32 to vector<1x8x16xf32>
    %145 = arith.mulf %144, %143 : vector<1x8x16xf32>
    %cst_23 = arith.constant 0.707106769 : f32
    %146 = vector.broadcast %cst_23 : f32 to vector<1x8x16xf32>
    %147 = arith.mulf %143, %146 : vector<1x8x16xf32>
    %148 = math.erf %147 : vector<1x8x16xf32>
    %cst_24 = arith.constant 1.000000e+00 : f32
    %149 = vector.broadcast %cst_24 : f32 to vector<1x8x16xf32>
    %150 = arith.addf %149, %148 : vector<1x8x16xf32>
    %151 = arith.mulf %145, %150 : vector<1x8x16xf32>
    %c0_25 = arith.constant 0 : index
    %c0_26 = arith.constant 0 : index
    %c0_27 = arith.constant 0 : index
    %152 = vector.load %arg7[%c0_25, %c0_26, %c0_27] : memref<1x8x16xf32, #tpu.memory_space<vmem>>, vector<1x8x16xf32>
    tpu.vector_store %arg7[%c0_25, %c0_26, %c0_27], %151 {strides = array<i32>} : memref<1x8x16xf32, #tpu.memory_space<vmem>>, vector<1x8x16xf32>,
    return
  }
  func.func @transform_0(%arg0: i32) -> (i32, i32, i32) {
    %c0_i32 = arith.constant 0 : i32
    %c0_i32_0 = arith.constant 0 : i32
    %c0_i32_1 = arith.constant 0 : i32
    return %arg0, %c0_i32, %c0_i32_0 : i32, i32, i32
  }
  func.func @transform_1(%arg0: i32) -> (i32, i32) {
    %c0_i32 = arith.constant 0 : i32
    %c0_i32_0 = arith.constant 0 : i32
    %c0_i32_1 = arith.constant 0 : i32
    return %c0_i32, %c0_i32_0 : i32, i32
  }
  func.func @transform_2(%arg0: i32) -> (i32, i32, i32) {
    %c0_i32 = arith.constant 0 : i32
    %c0_i32_0 = arith.constant 0 : i32
    %c0_i32_1 = arith.constant 0 : i32
    %c0_i32_2 = arith.constant 0 : i32
    return %c0_i32, %c0_i32_0, %c0_i32_1 : i32, i32, i32
  }
  func.func @transform_3(%arg0: i32) -> (i32, i32) {
    %c0_i32 = arith.constant 0 : i32
    %c0_i32_0 = arith.constant 0 : i32
    %c0_i32_1 = arith.constant 0 : i32
    return %c0_i32, %c0_i32_0 : i32, i32
  }
  func.func @transform_4(%arg0: i32) -> (i32, i32) {
    %c0_i32 = arith.constant 0 : i32
    %c0_i32_0 = arith.constant 0 : i32
    %c0_i32_1 = arith.constant 0 : i32
    return %c0_i32, %c0_i32_0 : i32, i32
  }
  func.func @transform_5(%arg0: i32) -> (i32, i32) {
    %c0_i32 = arith.constant 0 : i32
    %c0_i32_0 = arith.constant 0 : i32
    %c0_i32_1 = arith.constant 0 : i32
    return %c0_i32, %c0_i32_0 : i32, i32
  }
  func.func @transform_6(%arg0: i32) -> (i32, i32, i32) {
    %c0_i32 = arith.constant 0 : i32
    %c0_i32_0 = arith.constant 0 : i32
    %c0_i32_1 = arith.constant 0 : i32
    return %arg0, %c0_i32, %c0_i32_0 : i32, i32, i32
  }
}

</mosaic_0001>

<llo_original>
// kernel: tpu_custom_call.1
$region0: #{tpu_custom_call.1}
  #allocation0 [shape = 'u32[]', space=smem, size = 0x4, offset = 0x4, fixed_abs, tag = 'smem constant byte address 0x4 - core index']
  #allocation1 [shape = 'u32[144,128]{1,0:T(1,128)}', space=vmem, size = 0x12000, scoped, tag = 'internal scratch']
  %s0 = inlined_call_operand.vmem [shape: f32[2,4,16], index: 0, kind: input, shape index: {}]
  %s1 = inlined_call_operand.vmem [shape: f32[16,16], index: 1, kind: input, shape index: {}]
  %s2 = inlined_call_operand.hbm [shape: f32[4,8,16], index: 2, kind: input, shape index: {}]
  %s3 = inlined_call_operand.hbm [shape: f32[16,16], index: 3, kind: input, shape index: {}]
  %s4 = inlined_call_operand.vmem [shape: f32[8,4], index: 4, kind: input, shape index: {}]
  %s5 = inlined_call_operand.vmem [shape: f32[8,3], index: 5, kind: input, shape index: {}]
  %s6 = inlined_call_operand.hbm [shape: f32[2,8,16], index: 6, kind: output, shape index: {}]
  %s7 = sld [smem:[#allocation0]]
  $region65: #{tpu_custom_call.1} parent=0
    _
  %s9 = ssub.s32 1, %s7
  %s10 = scalar_select 0, %s9, %s7
  $region1: #{tpu_custom_call.1} parent=0
    #allocation2 [shape = 'u8[16384]{0}', space=vmem, size = 0x4000, scoped, tag = 'input window, operand 2, single buffered']
    #allocation3 [shape = 's32[2]{0}', space=sflag, size = 0x8, scoped, tag = 'scoped memory for tpu_custom_call.1']
    #allocation4 [shape = 's32[2]{0}', space=sflag, size = 0x8, scoped, tag = 'scoped memory for tpu_custom_call.1']
    #allocation5 [shape = 'u8[8192]{0}', space=vmem, size = 0x2000, scoped, tag = 'input window, operand 3, single buffered']
    #allocation6 [shape = 's32[1]{0}', space=sflag, size = 0x4, scoped, tag = 'scoped memory for tpu_custom_call.1']
    #allocation7 [shape = 'u8[8192]{0}', space=vmem, size = 0x2000, scoped, tag = 'output window, operand 0']
    %11 = vsyncpa [#allocation3], 0
    %12 = vsyncpa [#allocation6], 0
    %13 = vsyncpa [#allocation4], 0
    %s14 = scalar_lea.sflag [#allocation4], 1
    %15 = vsyncpa %s14, 0
    loop: start=0, step=1, limit=4
    $region2: #{tpu_custom_call.1} parent=1 // loop_pre_header
      _
    $region3: #{tpu_custom_call.1} parent=1 // loop_header
      %s17 = sphi 0, %s21
      %p18 = scmp.ge.s32.totalorder %s17, 4
      %s27 = sphi 0, %s29
      %s30 = sphi 0, %s27
      %s31 = sphi 0, %s30
      %s47 = sphi 0, %s31
      %s51 = sphi 0, %s51
      %s53 = sphi 0, %s51
      %s54 = sphi 0, %s53
      %s68 = sphi 0, %s54
      %s72 = sphi 0, %s72
      %s74 = sphi 0, %s72
      %s75 = sphi 0, %s74
      %s89 = sphi 0, %s75
      %s93 = sphi 0, %s93
      %s95 = sphi 0, %s93
      %s96 = sphi 0, %s95
      %s110 = sphi 0, %s96
      %s114 = sphi 0, %s114
      %s116 = sphi 0, %s114
      %s117 = sphi 0, %s116
      %s131 = sphi 0, %s117
      %s135 = sphi 0, %s135
      %s137 = sphi 0, %s135
      %s138 = sphi 0, %s137
      %s152 = sphi 0, %s138
      %s158 = sphi 0, %s160
      %s161 = sphi 0, %s158
      %s162 = sphi 0, %s161
      %s178 = sphi 0, %s162
    $region4: #{tpu_custom_call.1} parent=1 // loop_header_branch
      %20 = sbr.rel (%p18) target = $region8
    $region5: #{tpu_custom_call.1} parent=1 // loop_body
      %s22 = ssub.s32 %s17, 1
      %s23 = ssub.s32 %s17, 2
      %s24 = sadd.s32 %s17, 1
      %s25 = ssub.s32 %s17, %s24
      %p26 = scmp.eq.s32.totalorder %s25, 0
      %s28 = sadd.s32 %s27, 1
      %s29 = scalar_select %p26, %s27, %s28
      %p32 = pneg %p26
      %p33 = scmp.eq.s32.totalorder %s17, 1
      %p34 = por %p32, %p33
      %p35 = scmp.ne.s32.totalorder %s27, %s30
      %p36 = scmp.eq.s32.totalorder %s17, 0
      %p37 = por %p35, %p36
      %p38 = scmp.ne.s32.totalorder %s27, %s30
      %p39 = scmp.eq.s32.totalorder %s22, 1
      %p40 = por %p38, %p39
      %p41 = scmp.ne.s32.totalorder %s30, %s31
      %p42 = scmp.eq.s32.totalorder %s22, 0
      %p43 = por %p41, %p42
      %p44 = scmp.ne.s32.totalorder %s30, %s31
      %p45 = scmp.eq.s32.totalorder %s23, 1
      %p46 = por %p44, %p45
      %p48 = scmp.ne.s32.totalorder %s31, %s47
      %p49 = scmp.eq.s32.totalorder %s23, 0
      %p50 = por %p48, %p49
      %s52 = sadd.s32 %s51, 1
      %p55 = scmp.eq.s32.totalorder %s17, 1
      %p56 = scmp.ne.s32.totalorder %s51, %s53
      %p57 = scmp.eq.s32.totalorder %s17, 0
      %p58 = por %p56, %p57
      %p59 = scmp.ne.s32.totalorder %s51, %s53
      %p60 = scmp.eq.s32.totalorder %s22, 1
      %p61 = por %p59, %p60
      %p62 = scmp.ne.s32.totalorder %s53, %s54
      %p63 = scmp.eq.s32.totalorder %s22, 0
      %p64 = por %p62, %p63
      %p65 = scmp.ne.s32.totalorder %s53, %s54
      %p66 = scmp.eq.s32.totalorder %s23, 1
      %p67 = por %p65, %p66
      %p69 = scmp.ne.s32.totalorder %s54, %s68
      %p70 = scmp.eq.s32.totalorder %s23, 0
      %p71 = por %p69, %p70
      %s73 = sadd.s32 %s72, 1
      %p76 = scmp.eq.s32.totalorder %s17, 1
      %p77 = scmp.ne.s32.totalorder %s72, %s74
      %p78 = scmp.eq.s32.totalorder %s17, 0
      %p79 = por %p77, %p78
      %p80 = scmp.ne.s32.totalorder %s72, %s74
      %p81 = scmp.eq.s32.totalorder %s22, 1
      %p82 = por %p80, %p81
      %p83 = scmp.ne.s32.totalorder %s74, %s75
      %p84 = scmp.eq.s32.totalorder %s22, 0
      %p85 = por %p83, %p84
      %p86 = scmp.ne.s32.totalorder %s74, %s75
      %p87 = scmp.eq.s32.totalorder %s23, 1
      %p88 = por %p86, %p87
      %p90 = scmp.ne.s32.totalorder %s75, %s89
      %p91 = scmp.eq.s32.totalorder %s23, 0
      %p92 = por %p90, %p91
      %s94 = sadd.s32 %s93, 1
      %p97 = scmp.eq.s32.totalorder %s17, 1
      %p98 = scmp.ne.s32.totalorder %s93, %s95
      %p99 = scmp.eq.s32.totalorder %s17, 0
      %p100 = por %p98, %p99
      %p101 = scmp.ne.s32.totalorder %s93, %s95
      %p102 = scmp.eq.s32.totalorder %s22, 1
      %p103 = por %p101, %p102
      %p104 = scmp.ne.s32.totalorder %s95, %s96
      %p105 = scmp.eq.s32.totalorder %s22, 0
      %p106 = por %p104, %p105
      %p107 = scmp.ne.s32.totalorder %s95, %s96
      %p108 = scmp.eq.s32.totalorder %s23, 1
      %p109 = por %p107, %p108
      %p111 = scmp.ne.s32.totalorder %s96, %s110
      %p112 = scmp.eq.s32.totalorder %s23, 0
      %p113 = por %p111, %p112
      %s115 = sadd.s32 %s114, 1
      %p118 = scmp.eq.s32.totalorder %s17, 1
      %p119 = scmp.ne.s32.totalorder %s114, %s116
      %p120 = scmp.eq.s32.totalorder %s17, 0
      %p121 = por %p119, %p120
      %p122 = scmp.ne.s32.totalorder %s114, %s116
      %p123 = scmp.eq.s32.totalorder %s22, 1
      %p124 = por %p122, %p123
      %p125 = scmp.ne.s32.totalorder %s116, %s117
      %p126 = scmp.eq.s32.totalorder %s22, 0
      %p127 = por %p125, %p126
      %p128 = scmp.ne.s32.totalorder %s116, %s117
      %p129 = scmp.eq.s32.totalorder %s23, 1
      %p130 = por %p128, %p129
      %p132 = scmp.ne.s32.totalorder %s117, %s131
      %p133 = scmp.eq.s32.totalorder %s23, 0
      %p134 = por %p132, %p133
      %s136 = sadd.s32 %s135, 1
      %p139 = scmp.eq.s32.totalorder %s17, 1
      %p140 = scmp.ne.s32.totalorder %s135, %s137
      %p141 = scmp.eq.s32.totalorder %s17, 0
      %p142 = por %p140, %p141
      %p143 = scmp.ne.s32.totalorder %s135, %s137
      %p144 = scmp.eq.s32.totalorder %s22, 1
      %p145 = por %p143, %p144
      %p146 = scmp.ne.s32.totalorder %s137, %s138
      %p147 = scmp.eq.s32.totalorder %s22, 0
      %p148 = por %p146, %p147
      %p149 = scmp.ne.s32.totalorder %s137, %s138
      %p150 = scmp.eq.s32.totalorder %s23, 1
      %p151 = por %p149, %p150
      %p153 = scmp.ne.s32.totalorder %s138, %s152
      %p154 = scmp.eq.s32.totalorder %s23, 0
      %p155 = por %p153, %p154
      %s156 = ssub.s32 %s17, %s24
      %p157 = scmp.eq.s32.totalorder %s156, 0
      %s159 = sadd.s32 %s158, 1
      %s160 = scalar_select %p157, %s158, %s159
      %p163 = pneg %p157
      %p164 = scmp.eq.s32.totalorder %s17, 1
      %p165 = por %p163, %p164
      %p166 = scmp.ne.s32.totalorder %s158, %s161
      %p167 = scmp.eq.s32.totalorder %s17, 0
      %p168 = por %p166, %p167
      %p169 = scmp.ne.s32.totalorder %s158, %s161
      %p170 = scmp.eq.s32.totalorder %s22, 1
      %p171 = por %p169, %p170
      %p172 = scmp.ne.s32.totalorder %s161, %s162
      %p173 = scmp.eq.s32.totalorder %s22, 0
      %p174 = por %p172, %p173
      %p175 = scmp.ne.s32.totalorder %s161, %s162
      %p176 = scmp.eq.s32.totalorder %s23, 1
      %p177 = por %p175, %p176
      %p179 = scmp.ne.s32.totalorder %s162, %s178
      %p180 = scmp.eq.s32.totalorder %s23, 0
      %p181 = por %p179, %p180
      %p182 = scmp.le.s32.totalorder 1, %s17
      %p183 = scmp.lt.s32.totalorder %s17, 3
      %p184 = pnand %p182, %p183
      %p185 = pneg %p184
      // Predicated region
      $region9: #{tpu_custom_call.1} parent=5 // pred_check
        _
      $region10: #{tpu_custom_call.1} parent=5 // pred_check_branch
        %187 = sbr.rel (%p184) target = $region12
      $region11: #{tpu_custom_call.1} parent=5 // pred_region
        %s188 = ssub.s32 %s17, 1
        // Predicated region
        $region13: #{tpu_custom_call.1} parent=11 // pred_check
          %p189 = pneg %p64
        $region14: #{tpu_custom_call.1} parent=11 // pred_check_branch
          %191 = sbr.rel (%p189) target = $region16
        $region15: #{tpu_custom_call.1} parent=11 // pred_region
          _
        $region16: #{tpu_custom_call.1} parent=11 // pred_fallthru
          _
        // Predicated region
        $region17: #{tpu_custom_call.1} parent=11 // pred_check
          %p192 = pneg %p85
        $region18: #{tpu_custom_call.1} parent=11 // pred_check_branch
          %194 = sbr.rel (%p192) target = $region20
        $region19: #{tpu_custom_call.1} parent=11 // pred_region
          %s196 = ssub.s32 512, 512
          %197 = vsyncadd [#allocation3], %s196
          %s198 = sshll.u32 [#allocation2], 4
          %s199 = int_to_ptr.vmem [resolvable:$true] %s198
          %204 = dma.hbm_to_vmem [thread:$0]  %s2, 512, %s199, [#allocation3], 128, 128, 8
        $region20: #{tpu_custom_call.1} parent=11 // pred_fallthru
          _
        // Predicated region
        $region21: #{tpu_custom_call.1} parent=11 // pred_check
          %p205 = pneg %p106
        $region22: #{tpu_custom_call.1} parent=11 // pred_check_branch
          %207 = sbr.rel (%p205) target = $region24
        $region23: #{tpu_custom_call.1} parent=11 // pred_region
          %s209 = ssub.s32 256, 256
          %210 = vsyncadd [#allocation6], %s209
          %s211 = sshll.u32 [#allocation5], 4
          %s212 = int_to_ptr.vmem [resolvable:$true] %s211
          %217 = dma.hbm_to_vmem [thread:$0]  %s3, 256, %s212, [#allocation6], 128, 128, 8
        $region24: #{tpu_custom_call.1} parent=11 // pred_fallthru
          _
        // Predicated region
        $region25: #{tpu_custom_call.1} parent=11 // pred_check
          %p218 = pneg %p127
        $region26: #{tpu_custom_call.1} parent=11 // pred_check_branch
          %220 = sbr.rel (%p218) target = $region28
        $region27: #{tpu_custom_call.1} parent=11 // pred_region
          _
        $region28: #{tpu_custom_call.1} parent=11 // pred_fallthru
          _
        // Predicated region
        $region29: #{tpu_custom_call.1} parent=11 // pred_check
          %p221 = pneg %p148
        $region30: #{tpu_custom_call.1} parent=11 // pred_check_branch
          %223 = sbr.rel (%p221) target = $region32
        $region31: #{tpu_custom_call.1} parent=11 // pred_region
          _
        $region32: #{tpu_custom_call.1} parent=11 // pred_fallthru
          _
      $region12: #{tpu_custom_call.1} parent=5 // pred_fallthru
        _
      %p224 = scmp.lt.s32.totalorder %s17, 2
      // Predicated region
      $region33: #{tpu_custom_call.1} parent=5 // pred_check
        %p225 = pneg %p224
      $region34: #{tpu_custom_call.1} parent=5 // pred_check_branch
        %227 = sbr.rel (%p225) target = $region36
      $region35: #{tpu_custom_call.1} parent=5 // pred_region
        // Predicated region
        $region37: #{tpu_custom_call.1} parent=35 // pred_check
          %p228 = pneg %p37
        $region38: #{tpu_custom_call.1} parent=35 // pred_check_branch
          %230 = sbr.rel (%p228) target = $region40
        $region39: #{tpu_custom_call.1} parent=35 // pred_region
          %p231 = scmp.lt.s32.totalorder %s17, 1
          %s232 = scalar_select %p231, %s17, 1
          %s233 = smul.addr %s232, 4
          %s234 = scalar_lea.vmem %s0, %s233
        $region40: #{tpu_custom_call.1} parent=35 // pred_fallthru
          _
      $region36: #{tpu_custom_call.1} parent=5 // pred_fallthru
        _
      %p235 = scmp.le.s32.totalorder 1, %s17
      %p236 = scmp.lt.s32.totalorder %s17, 3
      %p237 = pnand %p235, %p236
      %p238 = pneg %p237
      // Predicated region
      $region41: #{tpu_custom_call.1} parent=5 // pred_check
        _
      $region42: #{tpu_custom_call.1} parent=5 // pred_check_branch
        %240 = sbr.rel (%p237) target = $region44
      $region43: #{tpu_custom_call.1} parent=5 // pred_region
        %s241 = ssub.s32 %s17, 1
        // Predicated region
        $region45: #{tpu_custom_call.1} parent=43 // pred_check
          %p242 = pneg %p85
        $region46: #{tpu_custom_call.1} parent=43 // pred_check_branch
          %244 = sbr.rel (%p242) target = $region48
        $region47: #{tpu_custom_call.1} parent=43 // pred_region
          %245 = dma.done [#allocation3], 512
        $region48: #{tpu_custom_call.1} parent=43 // pred_fallthru
          _
        // Predicated region
        $region49: #{tpu_custom_call.1} parent=43 // pred_check
          %p246 = pneg %p106
        $region50: #{tpu_custom_call.1} parent=43 // pred_check_branch
          %248 = sbr.rel (%p246) target = $region52
        $region51: #{tpu_custom_call.1} parent=43 // pred_region
          %249 = dma.done [#allocation6], 256
        $region52: #{tpu_custom_call.1} parent=43 // pred_fallthru
          _
        %p250 = scmp.lt.s32.totalorder %s22, 1
        %s251 = scalar_select %p250, %s22, 1
        %s252 = smul.addr %s251, 4
        %s253 = scalar_lea.vmem %s0, %s252
        %p254 = pneg %p43
        %p255 = pneg %p40
        %p256 = pneg %p64
        %p257 = pneg %p61
        %p258 = pneg %p85
        %p259 = pneg %p82
        %p260 = pneg %p106
        %p261 = pneg %p103
        %p262 = pneg %p127
        %p263 = pneg %p124
        %p264 = pneg %p148
        %p265 = pneg %p145
        %p266 = pneg %p174
        %p267 = pneg %p171
        %s268 = sand.u32 %s161, 1
        %s269 = scalar_lea.sflag [#allocation4], %s268
        %s270 = sand.u32 %s161, 1
        %s271 = smul.addr %s270, 8
        %s272 = scalar_lea.vmem [#allocation7], %s271
        %p273 = scmp.lt.s32.totalorder %s22, 1
        %s274 = scalar_select %p273, %s22, 1
        %s275 = smul.addr %s274, 4
        %s276 = scalar_lea.vmem %s0, %s275
        %v277 = vld [vmem:[%s276] sm:$0xf]
        %v278 = vld [vmem:[%s1] sm:$0xff]
        %v279 = vld [vmem:[%s1 + $0x8] sm:$0xff]
        %vm280 = vcmask 130048
        %v282 = vsel %vm280, %v277, 0
        %284 = vmatprep.subr.mxu0 0.0
        %285 = vmatpush1.msra.mxu0 0.0
        %286 = vmatprep.subr.mxu0 0.0
        %287 = vmatpush1.msra.mxu0 0.0
        %288 = vmatprep.subr.mxu0 0.0
        %289 = vmatpush1.msra.mxu0 0.0
        %290 = vmatprep.subr.mxu0 0.0
        %291 = vmatpush1.msra.mxu0 0.0
        %292 = vmatprep.subr.mxu0 0.0
        %293 = vmatpush1.msra.mxu0 0.0
        %294 = vmatprep.subr.mxu0 0.0
        %295 = vmatpush1.msra.mxu0 0.0
        %296 = vmatprep.subr.mxu0 0.0
        %297 = vmatpush1.msra.mxu0 0.0
        %298 = vmatprep.subr.mxu0 0.0
        %299 = vmatpush1.msra.mxu0 0.0
        %300 = vmatprep.subr.mxu0 0.0
        %301 = vmatpush1.msra.mxu0 0.0
        %302 = vmatprep.subr.mxu0 0.0
        %303 = vmatpush1.msra.mxu0 0.0
        %304 = vmatprep.subr.mxu0 0.0
        %305 = vmatpush1.msra.mxu0 0.0
        %306 = vmatprep.subr.mxu0 0.0
        %307 = vmatpush1.msra.mxu0 0.0
        %308 = vmatprep.subr.mxu0 0.0
        %309 = vmatpush1.msra.mxu0 0.0
        %310 = vmatprep.subr.mxu0 0.0
        %311 = vmatpush1.msra.mxu0 0.0
        %312 = vmatprep.subr.mxu0 0.0
        %313 = vmatpush1.msra.mxu0 %v279
        %314 = vmatprep.subr.mxu0 0.0
        %315 = vmatpush1.msra.mxu0 %v278
        %316 = vmatprep.subr.mxu0 0.0
        %317 = vmatpush2.msra.mxu0 0.0
        %318 = vmatprep.subr.mxu0 0.0
        %319 = vmatpush2.msra.mxu0 0.0
        %320 = vmatprep.subr.mxu0 0.0
        %321 = vmatpush2.msra.mxu0 0.0
        %322 = vmatprep.subr.mxu0 0.0
        %323 = vmatpush2.msra.mxu0 0.0
        %324 = vmatprep.subr.mxu0 0.0
        %325 = vmatpush2.msra.mxu0 0.0
        %326 = vmatprep.subr.mxu0 0.0
        %327 = vmatpush2.msra.mxu0 0.0
        %328 = vmatprep.subr.mxu0 0.0
        %329 = vmatpush2.msra.mxu0 0.0
        %330 = vmatprep.subr.mxu0 0.0
        %331 = vmatpush2.msra.mxu0 0.0
        %332 = vmatprep.subr.mxu0 0.0
        %333 = vmatpush2.msra.mxu0 0.0
        %334 = vmatprep.subr.mxu0 0.0
        %335 = vmatpush2.msra.mxu0 0.0
        %336 = vmatprep.subr.mxu0 0.0
        %337 = vmatpush2.msra.mxu0 0.0
        %338 = vmatprep.subr.mxu0 0.0
        %339 = vmatpush2.msra.mxu0 0.0
        %340 = vmatprep.subr.mxu0 0.0
        %341 = vmatpush2.msra.mxu0 0.0
        %342 = vmatprep.subr.mxu0 0.0
        %343 = vmatpush2.msra.mxu0 0.0
        %344 = vmatprep.subr.mxu0 0.0
        %345 = vmatpush2.msra.mxu0 0.0
        %346 = vmatprep.subr.mxu0 0.0
        %347 = vmatpush2.msra.mxu0 0.0
        %348 = vmatprep.mubr.f32.mxu0 0.0
        %349 = vmatmul.mubr.f32.gmra.mxu0 %v282
        %v350 = vpop.f32.mrf.mxu0
        %v351 = vadd.f32 0.0, %v350
        %v352 = vpop.f32.mrf.mxu0
        %353 = vdwg.mxu0
        %v354 = vld [vmem:[#allocation2] sm:$0xff]
        %v355 = vld [vmem:[#allocation2 + $0x8] sm:$0xff]
        %v356 = vld [vmem:[#allocation2 + $0x10] sm:$0xff]
        %v357 = vld [vmem:[#allocation2 + $0x18] sm:$0xff]
        %v358 = vlaneseq
        %v359 = vshrl.u32 %v358, 7
        %v360 = vsub.s32 0, %v359
        %v361 = vrot.slane %v351, %v360
        %v362 = vmul.f32 %v361, %v354
        %364 = vrot.lane.b32.xlu0 %v362, 120
        %v365 = vpop.permute.xlu0 %364
        %v367 = vsub.f32 %v362, %v365
        %v368 = vadd.f32 %v367, 0.0
        %370 = vrot.lane.b32.xlu0 %v354, 120
        %v371 = vpop.permute.xlu0 %370
        %v373 = vmul.f32 %v361, %v371
        %374 = vrot.lane.b32.xlu0 %v354, 8
        %v375 = vpop.permute.xlu0 %374
        %v377 = vmul.f32 %v361, %v375
        %379 = vrot.lane.b32.xlu0 %v377, 120
        %v380 = vpop.permute.xlu0 %379
        %v382 = vadd.f32 %v373, %v380
        %v383 = vadd.f32 %v382, 0.0
        %v384 = vlaneseq
        %v385 = vshrl.u32 %v384, 7
        %v386 = vsub.s32 1, %v385
        %v387 = vrot.slane %v351, %v386
        %v388 = vmul.f32 %v387, %v355
        %390 = vrot.lane.b32.xlu0 %v388, 120
        %v391 = vpop.permute.xlu0 %390
        %v393 = vsub.f32 %v388, %v391
        %v394 = vadd.f32 %v368, %v393
        %396 = vrot.lane.b32.xlu0 %v355, 120
        %v397 = vpop.permute.xlu0 %396
        %v399 = vmul.f32 %v387, %v397
        %400 = vrot.lane.b32.xlu0 %v355, 8
        %v401 = vpop.permute.xlu0 %400
        %v403 = vmul.f32 %v387, %v401
        %405 = vrot.lane.b32.xlu0 %v403, 120
        %v406 = vpop.permute.xlu0 %405
        %v408 = vadd.f32 %v399, %v406
        %v409 = vadd.f32 %v383, %v408
        %v410 = vlaneseq
        %v411 = vshrl.u32 %v410, 7
        %v412 = vsub.s32 2, %v411
        %v413 = vrot.slane %v351, %v412
        %v414 = vmul.f32 %v413, %v356
        %416 = vrot.lane.b32.xlu0 %v414, 120
        %v417 = vpop.permute.xlu0 %416
        %v419 = vsub.f32 %v414, %v417
        %v420 = vadd.f32 %v394, %v419
        %422 = vrot.lane.b32.xlu0 %v356, 120
        %v423 = vpop.permute.xlu0 %422
        %v425 = vmul.f32 %v413, %v423
        %426 = vrot.lane.b32.xlu0 %v356, 8
        %v427 = vpop.permute.xlu0 %426
        %v429 = vmul.f32 %v413, %v427
        %431 = vrot.lane.b32.xlu0 %v429, 120
        %v432 = vpop.permute.xlu0 %431
        %v434 = vadd.f32 %v425, %v432
        %v435 = vadd.f32 %v409, %v434
        %v436 = vlaneseq
        %v437 = vshrl.u32 %v436, 7
        %v438 = vsub.s32 3, %v437
        %v439 = vrot.slane %v351, %v438
        %v440 = vmul.f32 %v439, %v357
        %442 = vrot.lane.b32.xlu0 %v440, 120
        %v443 = vpop.permute.xlu0 %442
        %v445 = vsub.f32 %v440, %v443
        %v446 = vadd.f32 %v420, %v445
        %448 = vrot.lane.b32.xlu0 %v357, 120
        %v449 = vpop.permute.xlu0 %448
        %v451 = vmul.f32 %v439, %v449
        %452 = vrot.lane.b32.xlu0 %v357, 8
        %v453 = vpop.permute.xlu0 %452
        %v455 = vmul.f32 %v439, %v453
        %457 = vrot.lane.b32.xlu0 %v455, 120
        %v458 = vpop.permute.xlu0 %457
        %v460 = vadd.f32 %v451, %v458
        %v461 = vadd.f32 %v435, %v460
        %463 = vrot.lane.b32.xlu0 %v461, 8
        %v464 = vpop.permute.xlu0 %463
        %vm466 = vcmask 64512
        %v467 = vsel %vm466, %v446, %v464
        %v468 = vld [vmem:[#allocation5] sm:$0xff]
        %v469 = vld [vmem:[#allocation5 + $0x8] sm:$0xff]
        %v471 = vsel %vm280, %v467, 0
        %473 = vmatprep.subr.mxu0 0.0
        %474 = vmatpush1.msra.mxu0 0.0
        %475 = vmatprep.subr.mxu0 0.0
        %476 = vmatpush1.msra.mxu0 0.0
        %477 = vmatprep.subr.mxu0 0.0
        %478 = vmatpush1.msra.mxu0 0.0
        %479 = vmatprep.subr.mxu0 0.0
        %480 = vmatpush1.msra.mxu0 0.0
        %481 = vmatprep.subr.mxu0 0.0
        %482 = vmatpush1.msra.mxu0 0.0
        %483 = vmatprep.subr.mxu0 0.0
        %484 = vmatpush1.msra.mxu0 0.0
        %485 = vmatprep.subr.mxu0 0.0
        %486 = vmatpush1.msra.mxu0 0.0
        %487 = vmatprep.subr.mxu0 0.0
        %488 = vmatpush1.msra.mxu0 0.0
        %489 = vmatprep.subr.mxu0 0.0
        %490 = vmatpush1.msra.mxu0 0.0
        %491 = vmatprep.subr.mxu0 0.0
        %492 = vmatpush1.msra.mxu0 0.0
        %493 = vmatprep.subr.mxu0 0.0
        %494 = vmatpush1.msra.mxu0 0.0
        %495 = vmatprep.subr.mxu0 0.0
        %496 = vmatpush1.msra.mxu0 0.0
        %497 = vmatprep.subr.mxu0 0.0
        %498 = vmatpush1.msra.mxu0 0.0
        %499 = vmatprep.subr.mxu0 0.0
        %500 = vmatpush1.msra.mxu0 0.0
        %501 = vmatprep.subr.mxu0 0.0
        %502 = vmatpush1.msra.mxu0 %v469
        %503 = vmatprep.subr.mxu0 0.0
        %504 = vmatpush1.msra.mxu0 %v468
        %505 = vmatprep.subr.mxu0 0.0
        %506 = vmatpush2.msra.mxu0 0.0
        %507 = vmatprep.subr.mxu0 0.0
        %508 = vmatpush2.msra.mxu0 0.0
        %509 = vmatprep.subr.mxu0 0.0
        %510 = vmatpush2.msra.mxu0 0.0
        %511 = vmatprep.subr.mxu0 0.0
        %512 = vmatpush2.msra.mxu0 0.0
        %513 = vmatprep.subr.mxu0 0.0
        %514 = vmatpush2.msra.mxu0 0.0
        %515 = vmatprep.subr.mxu0 0.0
        %516 = vmatpush2.msra.mxu0 0.0
        %517 = vmatprep.subr.mxu0 0.0
        %518 = vmatpush2.msra.mxu0 0.0
        %519 = vmatprep.subr.mxu0 0.0
        %520 = vmatpush2.msra.mxu0 0.0
        %521 = vmatprep.subr.mxu0 0.0
        %522 = vmatpush2.msra.mxu0 0.0
        %523 = vmatprep.subr.mxu0 0.0
        %524 = vmatpush2.msra.mxu0 0.0
        %525 = vmatprep.subr.mxu0 0.0
        %526 = vmatpush2.msra.mxu0 0.0
        %527 = vmatprep.subr.mxu0 0.0
        %528 = vmatpush2.msra.mxu0 0.0
        %529 = vmatprep.subr.mxu0 0.0
        %530 = vmatpush2.msra.mxu0 0.0
        %531 = vmatprep.subr.mxu0 0.0
        %532 = vmatpush2.msra.mxu0 0.0
        %533 = vmatprep.subr.mxu0 0.0
        %534 = vmatpush2.msra.mxu0 0.0
        %535 = vmatprep.subr.mxu0 0.0
        %536 = vmatpush2.msra.mxu0 0.0
        %537 = vmatprep.mubr.f32.mxu0 0.0
        %538 = vmatmul.mubr.f32.gmra.mxu0 %v471
        %v539 = vpop.f32.mrf.mxu0
        %v540 = vadd.f32 0.0, %v539
        %v541 = vpop.f32.mrf.mxu0
        %542 = vdwg.mxu0
        %v543 = vld [vmem:[%s4] sm:$0xff]
        %vm544 = vcmask 31744
        %v546 = vsel %vm544, %v543, 0
        %vm548 = vcmask 1043456
        %v549 = vsel %vm548, %v277, 0
        %551 = vmatprep.subr.mxu0 0.0
        %552 = vmatpush1.msra.mxu0 0.0
        %553 = vmatprep.subr.mxu0 0.0
        %554 = vmatpush1.msra.mxu0 0.0
        %555 = vmatprep.subr.mxu0 0.0
        %556 = vmatpush1.msra.mxu0 0.0
        %557 = vmatprep.subr.mxu0 0.0
        %558 = vmatpush1.msra.mxu0 0.0
        %559 = vmatprep.subr.mxu0 0.0
        %560 = vmatpush1.msra.mxu0 0.0
        %561 = vmatprep.subr.mxu0 0.0
        %562 = vmatpush1.msra.mxu0 0.0
        %563 = vmatprep.subr.mxu0 0.0
        %564 = vmatpush1.msra.mxu0 0.0
        %565 = vmatprep.subr.mxu0 0.0
        %566 = vmatpush1.msra.mxu0 0.0
        %567 = vmatprep.subr.mxu0 0.0
        %568 = vmatpush1.msra.mxu0 0.0
        %569 = vmatprep.subr.mxu0 0.0
        %570 = vmatpush1.msra.mxu0 0.0
        %571 = vmatprep.subr.mxu0 0.0
        %572 = vmatpush1.msra.mxu0 0.0
        %573 = vmatprep.subr.mxu0 0.0
        %574 = vmatpush1.msra.mxu0 0.0
        %575 = vmatprep.subr.mxu0 0.0
        %576 = vmatpush1.msra.mxu0 0.0
        %577 = vmatprep.subr.mxu0 0.0
        %578 = vmatpush1.msra.mxu0 0.0
        %579 = vmatprep.subr.mxu0 0.0
        %580 = vmatpush1.msra.mxu0 0.0
        %581 = vmatprep.subr.mxu0 0.0
        %582 = vmatpush1.msra.mxu0 %v549
        %583 = vmatprep.subr.mxu0 0.0
        %584 = vmatpush2.msra.mxu0 0.0
        %585 = vmatprep.subr.mxu0 0.0
        %586 = vmatpush2.msra.mxu0 0.0
        %587 = vmatprep.subr.mxu0 0.0
        %588 = vmatpush2.msra.mxu0 0.0
        %589 = vmatprep.subr.mxu0 0.0
        %590 = vmatpush2.msra.mxu0 0.0
        %591 = vmatprep.subr.mxu0 0.0
        %592 = vmatpush2.msra.mxu0 0.0
        %593 = vmatprep.subr.mxu0 0.0
        %594 = vmatpush2.msra.mxu0 0.0
        %595 = vmatprep.subr.mxu0 0.0
        %596 = vmatpush2.msra.mxu0 0.0
        %597 = vmatprep.subr.mxu0 0.0
        %598 = vmatpush2.msra.mxu0 0.0
        %599 = vmatprep.subr.mxu0 0.0
        %600 = vmatpush2.msra.mxu0 0.0
        %601 = vmatprep.subr.mxu0 0.0
        %602 = vmatpush2.msra.mxu0 0.0
        %603 = vmatprep.subr.mxu0 0.0
        %604 = vmatpush2.msra.mxu0 0.0
        %605 = vmatprep.subr.mxu0 0.0
        %606 = vmatpush2.msra.mxu0 0.0
        %607 = vmatprep.subr.mxu0 0.0
        %608 = vmatpush2.msra.mxu0 0.0
        %609 = vmatprep.subr.mxu0 0.0
        %610 = vmatpush2.msra.mxu0 0.0
        %611 = vmatprep.subr.mxu0 0.0
        %612 = vmatpush2.msra.mxu0 0.0
        %613 = vmatprep.subr.mxu0 0.0
        %614 = vmatpush2.msra.mxu0 0.0
        %615 = vmatprep.mubr.f32.mxu0 0.0
        %616 = vmatmul.mubr.f32.gmra.mxu0 %v546
        %v617 = vpop.f32.mrf.mxu0
        %v618 = vadd.f32 0.0, %v617
        %v619 = vpop.f32.mrf.mxu0
        %620 = vdwg.mxu0
        %v621 = vld [vmem:[%s5] sm:$0xff]
        %v622 = vadd.f32 %v540, %v618
        %624 = vset.pattern.permute.xlu0 2
        %625 = vperm.xlu0 %624, %v621
        %v626 = vpop.permute.xlu0 %625
        %v628 = vadd.f32 %v622, %v626
        %v629 = vsel %vm280, %v628, 0.0
        %630 = vadd.xlane.f32.xlu0 %v629
        %v631 = vpop.xlane.xlu0 %630
        %v632 = vmul.f32 %v631, 0.0625
        %v633 = vmul.f32 %v628, %v628
        %v634 = vsel %vm280, %v633, 0.0
        %635 = vadd.xlane.f32.xlu0 %v634
        %v636 = vpop.xlane.xlu0 %635
        %v637 = vmul.f32 %v636, 0.0625
        %v638 = vmul.f32 %v632, %v632
        %v639 = vsub.f32 %v637, %v638
        %v640 = vsub.f32 %v628, %v632
        %v641 = vadd.f32 %v639, 1e-05
        %v642 = vrsqrt.pop %v641
        %v643 = vmul.f32 %v640, %v642
        %644 = vset.pattern.permute.xlu0 0
        %645 = vperm.xlu0 %644, %v621
        %v646 = vpop.permute.xlu0 %645
        %v648 = vmul.f32 %v646, %v643
        %649 = vset.pattern.permute.xlu0 1
        %650 = vperm.xlu0 %649, %v621
        %v651 = vpop.permute.xlu0 %650
        %v653 = vadd.f32 %v648, %v651
        %v654 = vmul.f32 %v653, 0.5
        %v655 = vmul.f32 %v653, 0.70710677
        %v656 = verf.f32.pop %v655
        %v657 = vadd.f32 %v656, 1.0
        %v658 = vmul.f32 %v654, %v657
        %659 = vst.msk [vmem:[%s272] sm:$0xff] %vm280, %v658
        %s660 = sand.u32 %s161, 1
        %s661 = scalar_lea.sflag [#allocation4], %s660
        %s662 = sand.u32 %s161, 1
        %s663 = smul.addr %s662, 8
        %s664 = scalar_lea.vmem [#allocation7], %s663
        // Predicated region
        $region53: #{tpu_custom_call.1} parent=43 // pred_check
          %p665 = pneg %p171
        $region54: #{tpu_custom_call.1} parent=43 // pred_check_branch
          %667 = sbr.rel (%p665) target = $region56
        $region55: #{tpu_custom_call.1} parent=43 // pred_region
          %s669 = ssub.s32 128, 128
          %670 = vsyncadd %s661, %s669
          %s671 = smul.addr %s22, 128
          %s672 = scalar_lea.hbm %s6, %s671
          %s674 = sshll.u32 %s664, 4
          %s675 = int_to_ptr.vmem [resolvable:$true] %s674
          %677 = dma.vmem_to_hbm [thread:$0]  %s675, 128, %s672, %s661
        $region56: #{tpu_custom_call.1} parent=43 // pred_fallthru
          _
      $region44: #{tpu_custom_call.1} parent=5 // pred_fallthru
        _
      %p678 = scmp.le.s32.totalorder 2, %s17
      // Predicated region
      $region57: #{tpu_custom_call.1} parent=5 // pred_check
        %p679 = pneg %p678
      $region58: #{tpu_custom_call.1} parent=5 // pred_check_branch
        %681 = sbr.rel (%p679) target = $region60
      $region59: #{tpu_custom_call.1} parent=5 // pred_region
        %s682 = ssub.s32 %s17, 2
        // Predicated region
        $region61: #{tpu_custom_call.1} parent=59 // pred_check
          %p683 = pneg %p177
        $region62: #{tpu_custom_call.1} parent=59 // pred_check_branch
          %685 = sbr.rel (%p683) target = $region64
        $region63: #{tpu_custom_call.1} parent=59 // pred_region
          %s686 = sand.u32 %s162, 1
          %s687 = scalar_lea.sflag [#allocation4], %s686
          %s688 = sand.u32 %s162, 1
          %s689 = smul.addr %s688, 8
          %s690 = scalar_lea.vmem [#allocation7], %s689
          %691 = dma.done %s687, 128
        $region64: #{tpu_custom_call.1} parent=59 // pred_fallthru
          _
      $region60: #{tpu_custom_call.1} parent=5 // pred_fallthru
        _
    $region6: #{tpu_custom_call.1} parent=1 // loop_footer
      %s21 = sadd.s32 1, %s17
    $region7: #{tpu_custom_call.1} parent=1 // loop_footer_branch
      %16 = sbr.rel target = $region3
    $region8: #{tpu_custom_call.1} parent=1 // loop_exit
      _
    %692 = vsyncpa [#allocation3], 1
    %s693 = scalar_lea.sflag [#allocation3], 1
    %694 = vsyncpa %s693, 1
    %695 = vsyncpa [#allocation6], 1
    %696 = vsyncpa [#allocation4], 1
    %s697 = scalar_lea.sflag [#allocation4], 1
    %698 = vsyncpa %s697, 1

</llo_original>
